<compile_context>
chip_gen: v6e
topology: v6e:2x2x1
jax: 0.10.0
libtpu: 0.0.40
codegen_flags: <defaults>
</compile_context>

<pallas_src>
import functools

import jax
import jax.numpy as jnp
from jax.experimental import pallas as pl
from jax.experimental.pallas import tpu as pltpu


def _round_up(x, m):
    return (x + m - 1) // m * m


def _unet_down_kernel(x_ref, w1_ref, b1_ref, w2_ref, b2_ref, o_ref,
                      *, img_w, taps):
    """relu(conv1) -> relu(conv2) -> 2x2 pool max for one batch image.

    Layout: activations are (C, S) with S = H*W flattened onto the 128-lane
    axis (lane-dense); channels live on sublanes.

    x_ref:  (1, Cin_p, S)      f32, input channels zero-padded to Cin_p % 8 == 0
    w1_ref: (Cmid_p, 9*Cin_p)  bf16, tap-major packed conv1 weights
    b1_ref: (Cmid_p, 1)        f32
    w2_ref: (Cout, 9*Cmid_p)   bf16, tap-major packed conv2 weights
    b2_ref: (Cout, 1)          f32
    o_ref:  (1, Cout, S)       f32, full-resolution 2x2 pool-max map
    """
    s = x_ref.shape[-1]

    def conv3x3_relu(a, w_ref, b_ref):
        # Build Xshift(9*C, S): one rolled copy of `a` per 3x3 tap.  Rolls are
        # XLU lane rotations (free issue slot); the concat is sublane-aligned
        # because C is padded to a multiple of 8.  Roll wrap-around only
        # pollutes pixels outside the valid conv region, which later stages
        # never read.
        parts = [a if d == 0 else pltpu.roll(a, shift=s - d, axis=1)
                 for d in taps]
        xs = jnp.concatenate(parts, axis=0).astype(jnp.bfloat16)  # (9*C, S)
        # Single deep MXU matmul (K = 9*C), bf16 operands, f32 accumulation.
        y = jnp.dot(w_ref[...], xs, preferred_element_type=jnp.float32)
        # Bias + ReLU stay in f32 on the VPU (v5e has no bf16 VPU path).
        return jnp.maximum(y + b_ref[...], 0.0)

    x = x_ref[0]                                      # (Cin_p, S)  f32
    a1 = conv3x3_relu(x, w1_ref, b1_ref)              # (Cmid_p, S) f32
    a2 = conv3x3_relu(a1, w2_ref, b2_ref)             # (Cout,  S) f32

    # 2x2 max-pool candidates via three more lane rolls + elementwise f32 max.
    m = a2
    for d in (1, img_w, img_w + 1):
        m = jnp.maximum(m, pltpu.roll(a2, shift=s - d, axis=1))

    # Lane-dense store of the full-resolution max map (last dim = S >= 128).
    o_ref[0] = m.astype(o_ref.dtype)


@jax.jit
def unet_down_pallas(x, w1_packed, b1_col, w2_packed, b2_col):
    """pool(relu(conv2(relu(conv1(x))))) for NCHW x; convs are 3x3 / valid."""
    n, c_in, h, w = x.shape
    # Pooling-index validity (roll wrap-around argument) requires H, W >= 6.
    assert h >= 6 and w >= 6, "Unet_down needs H, W >= 6"
    c_mid_p = w1_packed.shape[0]
    c_in_p = w1_packed.shape[1] // 9
    s = h * w
    hp, wp = (h - 4) // 2, (w - 4) // 2
    taps = tuple(dy * w + dx for dy in range(3) for dx in range(3))

    # NCHW is already (C, H*W)-contiguous -> free reshape; zero-pad channels
    # to the 8-aligned packed count so the in-kernel tap concat is tile-aligned.
    x_flat = x.reshape(n, c_in, s)
    if c_in_p > c_in:
        x_flat = jnp.pad(x_flat, ((0, 0), (0, c_in_p - c_in), (0, 0)))

    kernel = functools.partial(_unet_down_kernel, img_w=w, taps=taps)

    flops = 2 * n * s * 9 * (c_mid_p * c_in_p + c_in * c_mid_p)
    bytes_accessed = (4 * n * c_in_p * s                                # input
                      + 2 * 9 * (c_mid_p * c_in_p + c_in * c_mid_p)    # bf16 W
                      + 4 * (c_mid_p + c_in)                           # biases
                      + 4 * n * c_in * s)                              # max map

    m_full = pl.pallas_call(
        kernel,
        out_shape=jax.ShapeDtypeStruct((n, c_in, s), x.dtype),
        grid_spec=pltpu.PrefetchScalarGridSpec(
            num_scalar_prefetch=0,
            grid=(n,),
            in_specs=[
                pl.BlockSpec((1, c_in_p, s), lambda i: (i, 0, 0)),
                pl.BlockSpec((c_mid_p, 9 * c_in_p), lambda i: (0, 0)),
                pl.BlockSpec((c_mid_p, 1), lambda i: (0, 0)),
                pl.BlockSpec((c_in, 9 * c_mid_p), lambda i: (0, 0)),
                pl.BlockSpec((c_in, 1), lambda i: (0, 0)),
            ],
            out_specs=pl.BlockSpec((1, c_in, s), lambda i: (i, 0, 0)),
        ),
        compiler_params=pltpu.CompilerParams(
            dimension_semantics=("parallel",),
            vmem_limit_bytes=32 * 1024 * 1024,
        ),
        cost_estimate=pl.CostEstimate(
            flops=flops, transcendentals=0, bytes_accessed=bytes_accessed),
    )(x_flat, w1_packed, b1_col, w2_packed, b2_col)

    # Stride-2 decimation of the in-kernel pool-max map (pure indexing, no
    # arithmetic; fuses into a cheap strided copy in XLA).
    # TODO(synk): move the decimation in-kernel once Mosaic supports
    # lane-strided (minor-dim stride > 1) loads robustly.
    m_img = m_full.reshape(n, c_in, h, w)
    return m_img[:, :, :2 * hp:2, :2 * wp:2]


class UnetDownPallas:
    """JAX/Pallas port of Unet_down: conv3x3 -> relu -> conv3x3 -> relu -> maxpool."""

    def __init__(self, inchannel, outchannel, key):
        k1, k2, k3, k4 = jax.random.split(key, 4)
        b1_bound = (inchannel * 9) ** -0.5
        b2_bound = (outchannel * 9) ** -0.5
        # Deterministic synthetic init (uniform, PyTorch-like range).
        self.w1 = jax.random.uniform(
            k1, (outchannel, inchannel, 3, 3), jnp.float32, -b1_bound, b1_bound)
        self.b1 = jax.random.uniform(
            k2, (outchannel,), jnp.float32, -b1_bound, b1_bound)
        self.w2 = jax.random.uniform(
            k3, (inchannel, outchannel, 3, 3), jnp.float32, -b2_bound, b2_bound)
        self.b2 = jax.random.uniform(
            k4, (inchannel,), jnp.float32, -b2_bound, b2_bound)

        cin_p = _round_up(inchannel, 8)     # f32 sublane tile = 8
        cmid_p = _round_up(outchannel, 8)

        # Tap-major packing for contraction-side stacking:
        #   W1p[o, t*cin_p + ci] = w1[o, ci, dy, dx],  t = 3*dy + dx
        # Zero-padded channels contribute nothing; weights pre-cast to bf16
        # (MXU operands) once here, not per call.
        w1t = jnp.transpose(self.w1, (0, 2, 3, 1))               # (O, 3, 3, I)
        w1t = jnp.pad(w1t, ((0, cmid_p - outchannel), (0, 0), (0, 0),
                            (0, cin_p - inchannel)))
        self.w1_packed = w1t.reshape(cmid_p, 9 * cin_p).astype(jnp.bfloat16)
        self.b1_col = jnp.pad(self.b1, (0, cmid_p - outchannel)).reshape(cmid_p, 1)

        w2t = jnp.transpose(self.w2, (0, 2, 3, 1))               # (I, 3, 3, O)
        w2t = jnp.pad(w2t, ((0, 0), (0, 0), (0, 0), (0, cmid_p - outchannel)))
        self.w2_packed = w2t.reshape(inchannel, 9 * cmid_p).astype(jnp.bfloat16)
        self.b2_col = self.b2.reshape(inchannel, 1)

    def forward(self, x):
        return unet_down_pallas(x, self.w1_packed, self.b1_col,
                                self.w2_packed, self.b2_col)


if __name__ == "__main__":
    key = jax.random.PRNGKey(0)
    kx, kp = jax.random.split(key)

    N, Cin, H, W = 2, 4, 16, 16
    Cout = 8
    x = jax.random.normal(kx, (N, Cin, H, W), jnp.float32)

    mod = UnetDownPallas(Cin, Cout, kp)
    out = jax.block_until_ready(mod.forward(x))

    # Reference: the exact ops nn.Conv2d / F.relu / nn.MaxPool2d perform (f32).
    dn = ("NCHW", "OIHW", "NCHW")
    r = jax.lax.conv_general_dilated(
        x, mod.w1, window_strides=(1, 1), padding="VALID", dimension_numbers=dn)
    r = jnp.maximum(r + mod.b1.reshape(1, Cout, 1, 1), 0.0)
    r = jax.lax.conv_general_dilated(
        r, mod.w2, window_strides=(1, 1), padding="VALID", dimension_numbers=dn)
    r = jnp.maximum(r + mod.b2.reshape(1, Cin, 1, 1), 0.0)
    ref = jnp.maximum(
        jnp.maximum(r[:, :, 0::2, 0::2], r[:, :, 0::2, 1::2]),
        jnp.maximum(r[:, :, 1::2, 0::2], r[:, :, 1::2, 1::2]))

    assert out.shape == (N, Cin, (H - 4) // 2, (W - 4) // 2), out.shape
    # bf16 MXU operands with f32 accumulation -> loosened tolerance vs f32 ref.
    assert jnp.allclose(out, ref, atol=5e-2, rtol=5e-2), (
        float(jnp.max(jnp.abs(out - ref))))

    print("KERNEL_OK")
</pallas_src>

<mosaic_0001>
module attributes {stable_mosaic.version = 11 : i64} {
  func.func @_unet_down_kernel(%arg0: i32, %arg1: memref<1x8x256xf32, #tpu.memory_space<vmem>>, %arg2: memref<8x72xbf16, #tpu.memory_space<vmem>>, %arg3: memref<8x1xf32, #tpu.memory_space<vmem>>, %arg4: memref<4x72xbf16, #tpu.memory_space<vmem>>, %arg5: memref<4x1xf32, #tpu.memory_space<vmem>>, %arg6: memref<1x4x256xf32, #tpu.memory_space<vmem>>) attributes {dimension_semantics = [#tpu.dimension_semantics<parallel>], iteration_bounds = array<i64: 2>, scalar_prefetch = 0 : i64, scratch_operands = 0 : i64, tpu.core_type = #tpu.core_type<tc>, window_params = [{transform_indices = @transform_0, window_bounds = array<i64: 1, 8, 256>}, {pipeline_mode = #tpu.pipeline_mode<synchronous>, transform_indices = @transform_1, window_bounds = array<i64: 8, 72>}, {pipeline_mode = #tpu.pipeline_mode<synchronous>, transform_indices = @transform_2, window_bounds = array<i64: 8, 1>}, {pipeline_mode = #tpu.pipeline_mode<synchronous>, transform_indices = @transform_3, window_bounds = array<i64: 4, 72>}, {pipeline_mode = #tpu.pipeline_mode<synchronous>, transform_indices = @transform_4, window_bounds = array<i64: 4, 1>}, {transform_indices = @transform_5, window_bounds = array<i64: 1, 4, 256>}]} {
    %c0 = arith.constant 0 : index
    %c0_0 = arith.constant 0 : index
    %c0_1 = arith.constant 0 : index
    %0 = vector.load %arg1[%c0, %c0_0, %c0_1] : memref<1x8x256xf32, #tpu.memory_space<vmem>>, vector<1x8x256xf32>
    %1 = vector.shape_cast %0 : vector<1x8x256xf32> to vector<8x256xf32>
    %c255_i32 = arith.constant 255 : i32
    %2 = tpu.dynamic_rotate %1 by %c255_i32 dim 1 : vector<8x256xf32>, i32 -> vector<8x256xf32>
    %c254_i32 = arith.constant 254 : i32
    %3 = tpu.dynamic_rotate %1 by %c254_i32 dim 1 : vector<8x256xf32>, i32 -> vector<8x256xf32>
    %c240_i32 = arith.constant 240 : i32
    %4 = tpu.dynamic_rotate %1 by %c240_i32 dim 1 : vector<8x256xf32>, i32 -> vector<8x256xf32>
    %c239_i32 = arith.constant 239 : i32
    %5 = tpu.dynamic_rotate %1 by %c239_i32 dim 1 : vector<8x256xf32>, i32 -> vector<8x256xf32>
    %c238_i32 = arith.constant 238 : i32
    %6 = tpu.dynamic_rotate %1 by %c238_i32 dim 1 : vector<8x256xf32>, i32 -> vector<8x256xf32>
    %c224_i32 = arith.constant 224 : i32
    %7 = tpu.dynamic_rotate %1 by %c224_i32 dim 1 : vector<8x256xf32>, i32 -> vector<8x256xf32>
    %c223_i32 = arith.constant 223 : i32
    %8 = tpu.dynamic_rotate %1 by %c223_i32 dim 1 : vector<8x256xf32>, i32 -> vector<8x256xf32>
    %c222_i32 = arith.constant 222 : i32
    %9 = tpu.dynamic_rotate %1 by %c222_i32 dim 1 : vector<8x256xf32>, i32 -> vector<8x256xf32>
    %10 = tpu.concatenate %1, %2, %3, %4, %5, %6, %7, %8, %9 in 0 : vector<8x256xf32>, vector<8x256xf32>, vector<8x256xf32>, vector<8x256xf32>, vector<8x256xf32>, vector<8x256xf32>, vector<8x256xf32>, vector<8x256xf32>, vector<8x256xf32> -> vector<72x256xf32>
    %11 = arith.truncf %10 : vector<72x256xf32> to vector<72x256xbf16>
    %c0_2 = arith.constant 0 : index
    %c0_3 = arith.constant 0 : index
    %12 = vector.load %arg2[%c0_2, %c0_3] : memref<8x72xbf16, #tpu.memory_space<vmem>>, vector<8x72xbf16>
    %cst = arith.constant dense<0.000000e+00> : vector<8x256xf32>
    %13 = tpu.matmul %12, %11, %cst {dimension_numbers = #tpu.dot_dimension_numbers<[1], [0], [0], [1], [0, 0, 1, 1], [], []>} : vector<8x72xbf16>, vector<72x256xbf16>, vector<8x256xf32> -> vector<8x256xf32>
    %c0_4 = arith.constant 0 : index
    %c0_5 = arith.constant 0 : index
    %14 = vector.load %arg3[%c0_4, %c0_5] : memref<8x1xf32, #tpu.memory_space<vmem>>, vector<8x1xf32>
    %15 = vector.broadcast %14 : vector<8x1xf32> to vector<8x256xf32>
    %16 = arith.addf %13, %15 : vector<8x256xf32>
    %cst_6 = arith.constant 0.000000e+00 : f32
    %17 = vector.broadcast %cst_6 : f32 to vector<8x256xf32>
    %18 = arith.maximumf %16, %17 : vector<8x256xf32>
    %c255_i32_7 = arith.constant 255 : i32
    %19 = tpu.dynamic_rotate %18 by %c255_i32_7 dim 1 : vector<8x256xf32>, i32 -> vector<8x256xf32>
    %c254_i32_8 = arith.constant 254 : i32
    %20 = tpu.dynamic_rotate %18 by %c254_i32_8 dim 1 : vector<8x256xf32>, i32 -> vector<8x256xf32>
    %c240_i32_9 = arith.constant 240 : i32
    %21 = tpu.dynamic_rotate %18 by %c240_i32_9 dim 1 : vector<8x256xf32>, i32 -> vector<8x256xf32>
    %c239_i32_10 = arith.constant 239 : i32
    %22 = tpu.dynamic_rotate %18 by %c239_i32_10 dim 1 : vector<8x256xf32>, i32 -> vector<8x256xf32>
    %c238_i32_11 = arith.constant 238 : i32
    %23 = tpu.dynamic_rotate %18 by %c238_i32_11 dim 1 : vector<8x256xf32>, i32 -> vector<8x256xf32>
    %c224_i32_12 = arith.constant 224 : i32
    %24 = tpu.dynamic_rotate %18 by %c224_i32_12 dim 1 : vector<8x256xf32>, i32 -> vector<8x256xf32>
    %c223_i32_13 = arith.constant 223 : i32
    %25 = tpu.dynamic_rotate %18 by %c223_i32_13 dim 1 : vector<8x256xf32>, i32 -> vector<8x256xf32>
    %c222_i32_14 = arith.constant 222 : i32
    %26 = tpu.dynamic_rotate %18 by %c222_i32_14 dim 1 : vector<8x256xf32>, i32 -> vector<8x256xf32>
    %27 = tpu.concatenate %18, %19, %20, %21, %22, %23, %24, %25, %26 in 0 : vector<8x256xf32>, vector<8x256xf32>, vector<8x256xf32>, vector<8x256xf32>, vector<8x256xf32>, vector<8x256xf32>, vector<8x256xf32>, vector<8x256xf32>, vector<8x256xf32> -> vector<72x256xf32>
    %28 = arith.truncf %27 : vector<72x256xf32> to vector<72x256xbf16>
    %c0_15 = arith.constant 0 : index
    %c0_16 = arith.constant 0 : index
    %29 = vector.load %arg4[%c0_15, %c0_16] : memref<4x72xbf16, #tpu.memory_space<vmem>>, vector<4x72xbf16>
    %cst_17 = arith.constant dense<0.000000e+00> : vector<4x256xf32>
    %30 = tpu.matmul %29, %28, %cst_17 {dimension_numbers = #tpu.dot_dimension_numbers<[1], [0], [0], [1], [0, 0, 1, 1], [], []>} : vector<4x72xbf16>, vector<72x256xbf16>, vector<4x256xf32> -> vector<4x256xf32>
    %c0_18 = arith.constant 0 : index
    %c0_19 = arith.constant 0 : index
    %31 = vector.load %arg5[%c0_18, %c0_19] : memref<4x1xf32, #tpu.memory_space<vmem>>, vector<4x1xf32>
    %32 = vector.broadcast %31 : vector<4x1xf32> to vector<4x256xf32>
    %33 = arith.addf %30, %32 : vector<4x256xf32>
    %cst_20 = arith.constant 0.000000e+00 : f32
    %34 = vector.broadcast %cst_20 : f32 to vector<4x256xf32>
    %35 = arith.maximumf %33, %34 : vector<4x256xf32>
    %c255_i32_21 = arith.constant 255 : i32
    %36 = tpu.dynamic_rotate %35 by %c255_i32_21 dim 1 : vector<4x256xf32>, i32 -> vector<4x256xf32>
    %37 = arith.maximumf %35, %36 : vector<4x256xf32>
    %c240_i32_22 = arith.constant 240 : i32
    %38 = tpu.dynamic_rotate %35 by %c240_i32_22 dim 1 : vector<4x256xf32>, i32 -> vector<4x256xf32>
    %39 = arith.maximumf %37, %38 : vector<4x256xf32>
    %c239_i32_23 = arith.constant 239 : i32
    %40 = tpu.dynamic_rotate %35 by %c239_i32_23 dim 1 : vector<4x256xf32>, i32 -> vector<4x256xf32>
    %41 = arith.maximumf %39, %40 : vector<4x256xf32>
    %c0_24 = arith.constant 0 : index
    %c0_25 = arith.constant 0 : index
    %c0_26 = arith.constant 0 : index
    %42 = vector.load %arg6[%c0_24, %c0_25, %c0_26] : memref<1x4x256xf32, #tpu.memory_space<vmem>>, vector<1x4x256xf32>
    %43 = vector.shape_cast %42 : vector<1x4x256xf32> to vector<4x256xf32>
    %44 = vector.shape_cast %41 : vector<4x256xf32> to vector<1x4x256xf32>
    tpu.vector_store %arg6[%c0_24, %c0_25, %c0_26], %44 {strides = array<i32>} : memref<1x4x256xf32, #tpu.memory_space<vmem>>, vector<1x4x256xf32>,
    return
  }
  func.func @transform_0(%arg0: i32) -> (i32, i32, i32) {
    %c0_i32 = arith.constant 0 : i32
    %c0_i32_0 = arith.constant 0 : i32
    %c0_i32_1 = arith.constant 0 : i32
    return %arg0, %c0_i32, %c0_i32_0 : i32, i32, i32
  }
  func.func @transform_1(%arg0: i32) -> (i32, i32) {
    %c0_i32 = arith.constant 0 : i32
    %c0_i32_0 = arith.constant 0 : i32
    %c0_i32_1 = arith.constant 0 : i32
    return %c0_i32, %c0_i32_0 : i32, i32
  }
  func.func @transform_2(%arg0: i32) -> (i32, i32) {
    %c0_i32 = arith.constant 0 : i32
    %c0_i32_0 = arith.constant 0 : i32
    %c0_i32_1 = arith.constant 0 : i32
    return %c0_i32, %c0_i32_0 : i32, i32
  }
  func.func @transform_3(%arg0: i32) -> (i32, i32) {
    %c0_i32 = arith.constant 0 : i32
    %c0_i32_0 = arith.constant 0 : i32
    %c0_i32_1 = arith.constant 0 : i32
    return %c0_i32, %c0_i32_0 : i32, i32
  }
  func.func @transform_4(%arg0: i32) -> (i32, i32) {
    %c0_i32 = arith.constant 0 : i32
    %c0_i32_0 = arith.constant 0 : i32
    %c0_i32_1 = arith.constant 0 : i32
    return %c0_i32, %c0_i32_0 : i32, i32
  }
  func.func @transform_5(%arg0: i32) -> (i32, i32, i32) {
    %c0_i32 = arith.constant 0 : i32
    %c0_i32_0 = arith.constant 0 : i32
    %c0_i32_1 = arith.constant 0 : i32
    return %arg0, %c0_i32, %c0_i32_0 : i32, i32, i32
  }
}

</mosaic_0001>

<llo_original>
// kernel: unet_down_pallas.1
$region0: #{unet_down_pallas.1}
  #allocation0 [shape = 'u32[]', space=smem, size = 0x4, offset = 0x4, fixed_abs, tag = 'smem constant byte address 0x4 - core index']
  #allocation1 [shape = 'u32[144,128]{1,0:T(1,128)}', space=vmem, size = 0x12000, scoped, tag = 'internal scratch']
  %s0 = inlined_call_operand.vmem [shape: f32[2,8,256], index: 0, kind: input, shape index: {}]
  %s1 = inlined_call_operand.vmem [shape: bf16[8,72], index: 1, kind: input, shape index: {}]
  %s2 = inlined_call_operand.vmem [shape: f32[8,1], index: 2, kind: input, shape index: {}]
  %s3 = inlined_call_operand.vmem [shape: bf16[4,72], index: 3, kind: input, shape index: {}]
  %s4 = inlined_call_operand.vmem [shape: f32[4,1], index: 4, kind: input, shape index: {}]
  %s5 = inlined_call_operand.vmem [shape: f32[2,4,256], index: 5, kind: output, shape index: {}]
  %s6 = sld [smem:[#allocation0]]
  $region53: #{unet_down_pallas.1} parent=0
    _
  %s8 = ssub.s32 1, %s6
  %s9 = scalar_select 0, %s8, %s6
  loop: start=0, step=1, limit=4
  $region2: #{unet_down_pallas.1} parent=0 // loop_pre_header
    _
  $region3: #{unet_down_pallas.1} parent=0 // loop_header
    %s11 = sphi 0, %s15
    %p12 = scmp.ge.s32.totalorder %s11, 4
    %s21 = sphi 0, %s23
    %s24 = sphi 0, %s21
    %s25 = sphi 0, %s24
    %s41 = sphi 0, %s25
    %s45 = sphi 0, %s45
    %s47 = sphi 0, %s45
    %s48 = sphi 0, %s47
    %s62 = sphi 0, %s48
    %s66 = sphi 0, %s66
    %s68 = sphi 0, %s66
    %s69 = sphi 0, %s68
    %s83 = sphi 0, %s69
    %s87 = sphi 0, %s87
    %s89 = sphi 0, %s87
    %s90 = sphi 0, %s89
    %s104 = sphi 0, %s90
    %s108 = sphi 0, %s108
    %s110 = sphi 0, %s108
    %s111 = sphi 0, %s110
    %s125 = sphi 0, %s111
    %s131 = sphi 0, %s133
    %s134 = sphi 0, %s131
    %s135 = sphi 0, %s134
    %s151 = sphi 0, %s135
  $region4: #{unet_down_pallas.1} parent=0 // loop_header_branch
    %14 = sbr.rel (%p12) target = $region8
  $region5: #{unet_down_pallas.1} parent=0 // loop_body
    %s16 = ssub.s32 %s11, 1
    %s17 = ssub.s32 %s11, 2
    %s18 = sadd.s32 %s11, 1
    %s19 = ssub.s32 %s11, %s18
    %p20 = scmp.eq.s32.totalorder %s19, 0
    %s22 = sadd.s32 %s21, 1
    %s23 = scalar_select %p20, %s21, %s22
    %p26 = pneg %p20
    %p27 = scmp.eq.s32.totalorder %s11, 1
    %p28 = por %p26, %p27
    %p29 = scmp.ne.s32.totalorder %s21, %s24
    %p30 = scmp.eq.s32.totalorder %s11, 0
    %p31 = por %p29, %p30
    %p32 = scmp.ne.s32.totalorder %s21, %s24
    %p33 = scmp.eq.s32.totalorder %s16, 1
    %p34 = por %p32, %p33
    %p35 = scmp.ne.s32.totalorder %s24, %s25
    %p36 = scmp.eq.s32.totalorder %s16, 0
    %p37 = por %p35, %p36
    %p38 = scmp.ne.s32.totalorder %s24, %s25
    %p39 = scmp.eq.s32.totalorder %s17, 1
    %p40 = por %p38, %p39
    %p42 = scmp.ne.s32.totalorder %s25, %s41
    %p43 = scmp.eq.s32.totalorder %s17, 0
    %p44 = por %p42, %p43
    %s46 = sadd.s32 %s45, 1
    %p49 = scmp.eq.s32.totalorder %s11, 1
    %p50 = scmp.ne.s32.totalorder %s45, %s47
    %p51 = scmp.eq.s32.totalorder %s11, 0
    %p52 = por %p50, %p51
    %p53 = scmp.ne.s32.totalorder %s45, %s47
    %p54 = scmp.eq.s32.totalorder %s16, 1
    %p55 = por %p53, %p54
    %p56 = scmp.ne.s32.totalorder %s47, %s48
    %p57 = scmp.eq.s32.totalorder %s16, 0
    %p58 = por %p56, %p57
    %p59 = scmp.ne.s32.totalorder %s47, %s48
    %p60 = scmp.eq.s32.totalorder %s17, 1
    %p61 = por %p59, %p60
    %p63 = scmp.ne.s32.totalorder %s48, %s62
    %p64 = scmp.eq.s32.totalorder %s17, 0
    %p65 = por %p63, %p64
    %s67 = sadd.s32 %s66, 1
    %p70 = scmp.eq.s32.totalorder %s11, 1
    %p71 = scmp.ne.s32.totalorder %s66, %s68
    %p72 = scmp.eq.s32.totalorder %s11, 0
    %p73 = por %p71, %p72
    %p74 = scmp.ne.s32.totalorder %s66, %s68
    %p75 = scmp.eq.s32.totalorder %s16, 1
    %p76 = por %p74, %p75
    %p77 = scmp.ne.s32.totalorder %s68, %s69
    %p78 = scmp.eq.s32.totalorder %s16, 0
    %p79 = por %p77, %p78
    %p80 = scmp.ne.s32.totalorder %s68, %s69
    %p81 = scmp.eq.s32.totalorder %s17, 1
    %p82 = por %p80, %p81
    %p84 = scmp.ne.s32.totalorder %s69, %s83
    %p85 = scmp.eq.s32.totalorder %s17, 0
    %p86 = por %p84, %p85
    %s88 = sadd.s32 %s87, 1
    %p91 = scmp.eq.s32.totalorder %s11, 1
    %p92 = scmp.ne.s32.totalorder %s87, %s89
    %p93 = scmp.eq.s32.totalorder %s11, 0
    %p94 = por %p92, %p93
    %p95 = scmp.ne.s32.totalorder %s87, %s89
    %p96 = scmp.eq.s32.totalorder %s16, 1
    %p97 = por %p95, %p96
    %p98 = scmp.ne.s32.totalorder %s89, %s90
    %p99 = scmp.eq.s32.totalorder %s16, 0
    %p100 = por %p98, %p99
    %p101 = scmp.ne.s32.totalorder %s89, %s90
    %p102 = scmp.eq.s32.totalorder %s17, 1
    %p103 = por %p101, %p102
    %p105 = scmp.ne.s32.totalorder %s90, %s104
    %p106 = scmp.eq.s32.totalorder %s17, 0
    %p107 = por %p105, %p106
    %s109 = sadd.s32 %s108, 1
    %p112 = scmp.eq.s32.totalorder %s11, 1
    %p113 = scmp.ne.s32.totalorder %s108, %s110
    %p114 = scmp.eq.s32.totalorder %s11, 0
    %p115 = por %p113, %p114
    %p116 = scmp.ne.s32.totalorder %s108, %s110
    %p117 = scmp.eq.s32.totalorder %s16, 1
    %p118 = por %p116, %p117
    %p119 = scmp.ne.s32.totalorder %s110, %s111
    %p120 = scmp.eq.s32.totalorder %s16, 0
    %p121 = por %p119, %p120
    %p122 = scmp.ne.s32.totalorder %s110, %s111
    %p123 = scmp.eq.s32.totalorder %s17, 1
    %p124 = por %p122, %p123
    %p126 = scmp.ne.s32.totalorder %s111, %s125
    %p127 = scmp.eq.s32.totalorder %s17, 0
    %p128 = por %p126, %p127
    %s129 = ssub.s32 %s11, %s18
    %p130 = scmp.eq.s32.totalorder %s129, 0
    %s132 = sadd.s32 %s131, 1
    %s133 = scalar_select %p130, %s131, %s132
    %p136 = pneg %p130
    %p137 = scmp.eq.s32.totalorder %s11, 1
    %p138 = por %p136, %p137
    %p139 = scmp.ne.s32.totalorder %s131, %s134
    %p140 = scmp.eq.s32.totalorder %s11, 0
    %p141 = por %p139, %p140
    %p142 = scmp.ne.s32.totalorder %s131, %s134
    %p143 = scmp.eq.s32.totalorder %s16, 1
    %p144 = por %p142, %p143
    %p145 = scmp.ne.s32.totalorder %s134, %s135
    %p146 = scmp.eq.s32.totalorder %s16, 0
    %p147 = por %p145, %p146
    %p148 = scmp.ne.s32.totalorder %s134, %s135
    %p149 = scmp.eq.s32.totalorder %s17, 1
    %p150 = por %p148, %p149
    %p152 = scmp.ne.s32.totalorder %s135, %s151
    %p153 = scmp.eq.s32.totalorder %s17, 0
    %p154 = por %p152, %p153
    %p155 = scmp.le.s32.totalorder 1, %s11
    %p156 = scmp.lt.s32.totalorder %s11, 3
    %p157 = pnand %p155, %p156
    %p158 = pneg %p157
    // Predicated region
    $region9: #{unet_down_pallas.1} parent=5 // pred_check
      _
    $region10: #{unet_down_pallas.1} parent=5 // pred_check_branch
      %160 = sbr.rel (%p157) target = $region12
    $region11: #{unet_down_pallas.1} parent=5 // pred_region
      %s161 = ssub.s32 %s11, 1
      // Predicated region
      $region13: #{unet_down_pallas.1} parent=11 // pred_check
        %p162 = pneg %p58
      $region14: #{unet_down_pallas.1} parent=11 // pred_check_branch
        %164 = sbr.rel (%p162) target = $region16
      $region15: #{unet_down_pallas.1} parent=11 // pred_region
        _
      $region16: #{unet_down_pallas.1} parent=11 // pred_fallthru
        _
      // Predicated region
      $region17: #{unet_down_pallas.1} parent=11 // pred_check
        %p165 = pneg %p79
      $region18: #{unet_down_pallas.1} parent=11 // pred_check_branch
        %167 = sbr.rel (%p165) target = $region20
      $region19: #{unet_down_pallas.1} parent=11 // pred_region
        _
      $region20: #{unet_down_pallas.1} parent=11 // pred_fallthru
        _
      // Predicated region
      $region21: #{unet_down_pallas.1} parent=11 // pred_check
        %p168 = pneg %p100
      $region22: #{unet_down_pallas.1} parent=11 // pred_check_branch
        %170 = sbr.rel (%p168) target = $region24
      $region23: #{unet_down_pallas.1} parent=11 // pred_region
        _
      $region24: #{unet_down_pallas.1} parent=11 // pred_fallthru
        _
      // Predicated region
      $region25: #{unet_down_pallas.1} parent=11 // pred_check
        %p171 = pneg %p121
      $region26: #{unet_down_pallas.1} parent=11 // pred_check_branch
        %173 = sbr.rel (%p171) target = $region28
      $region27: #{unet_down_pallas.1} parent=11 // pred_region
        _
      $region28: #{unet_down_pallas.1} parent=11 // pred_fallthru
        _
    $region12: #{unet_down_pallas.1} parent=5 // pred_fallthru
      _
    %p174 = scmp.lt.s32.totalorder %s11, 2
    // Predicated region
    $region29: #{unet_down_pallas.1} parent=5 // pred_check
      %p175 = pneg %p174
    $region30: #{unet_down_pallas.1} parent=5 // pred_check_branch
      %177 = sbr.rel (%p175) target = $region32
    $region31: #{unet_down_pallas.1} parent=5 // pred_region
      // Predicated region
      $region33: #{unet_down_pallas.1} parent=31 // pred_check
        %p178 = pneg %p31
      $region34: #{unet_down_pallas.1} parent=31 // pred_check_branch
        %180 = sbr.rel (%p178) target = $region36
      $region35: #{unet_down_pallas.1} parent=31 // pred_region
        %p181 = scmp.lt.s32.totalorder %s11, 1
        %s182 = scalar_select %p181, %s11, 1
        %s183 = smul.addr %s182, 2
        %s184 = smul.addr %s183, 8
        %s185 = scalar_lea.vmem %s0, %s184
      $region36: #{unet_down_pallas.1} parent=31 // pred_fallthru
        _
    $region32: #{unet_down_pallas.1} parent=5 // pred_fallthru
      _
    %p186 = scmp.le.s32.totalorder 1, %s11
    %p187 = scmp.lt.s32.totalorder %s11, 3
    %p188 = pnand %p186, %p187
    %p189 = pneg %p188
    // Predicated region
    $region37: #{unet_down_pallas.1} parent=5 // pred_check
      _
    $region38: #{unet_down_pallas.1} parent=5 // pred_check_branch
      %191 = sbr.rel (%p188) target = $region40
    $region39: #{unet_down_pallas.1} parent=5 // pred_region
      %s192 = ssub.s32 %s11, 1
      %p193 = scmp.lt.s32.totalorder %s16, 1
      %s194 = scalar_select %p193, %s16, 1
      %s195 = smul.addr %s194, 2
      %s196 = smul.addr %s195, 8
      %s197 = scalar_lea.vmem %s0, %s196
      %p198 = pneg %p37
      %p199 = pneg %p34
      %p200 = pneg %p58
      %p201 = pneg %p55
      %p202 = pneg %p79
      %p203 = pneg %p76
      %p204 = pneg %p100
      %p205 = pneg %p97
      %p206 = pneg %p121
      %p207 = pneg %p118
      %p208 = pneg %p147
      %p209 = pneg %p144
      %p210 = scmp.lt.s32.totalorder %s16, 1
      %s211 = scalar_select %p210, %s16, 1
      %s212 = smul.addr %s211, 2
      %s213 = smul.addr %s212, 4
      %s214 = scalar_lea.vmem %s5, %s213
      %p215 = scmp.lt.s32.totalorder %s16, 1
      %s216 = scalar_select %p215, %s16, 1
      %s217 = smul.addr %s216, 2
      %s218 = smul.addr %s217, 8
      %s219 = scalar_lea.vmem %s0, %s218
      %p220 = scmp.lt.s32.totalorder %s16, 1
      %s221 = scalar_select %p220, %s16, 1
      %s222 = smul.addr %s221, 2
      %s223 = smul.addr %s222, 4
      %s224 = scalar_lea.vmem %s5, %s223
      %v226 = vld [vmem:[%s219] sm:$0xff]
      %v227 = vld [vmem:[%s219 + $0x8] sm:$0xff]
      %228 = vrot.lane.b32.xlu0 %v226, 127
      %v229 = vpop.permute.xlu0 %228
      %230 = vrot.lane.b32.xlu0 %v227, 127
      %v231 = vpop.permute.xlu0 %230
      %v232 = vlaneseq
      %v233 = vand.u32 %v232, 127
      %vm234 = vcmp.lt.s32.totalorder %v233, 127
      %v235 = vsel %vm234, %v229, %v231
      %v236 = vsel %vm234, %v231, %v229
      %237 = vrot.lane.b32.xlu0 %v226, 126
      %v238 = vpop.permute.xlu0 %237
      %239 = vrot.lane.b32.xlu0 %v227, 126
      %v240 = vpop.permute.xlu0 %239
      %vm241 = vcmp.lt.s32.totalorder %v233, 126
      %v242 = vsel %vm241, %v238, %v240
      %v243 = vsel %vm241, %v240, %v238
      %244 = vrot.lane.b32.xlu0 %v226, 112
      %v245 = vpop.permute.xlu0 %244
      %246 = vrot.lane.b32.xlu0 %v227, 112
      %v247 = vpop.permute.xlu0 %246
      %vm248 = vcmp.lt.s32.totalorder %v233, 112
      %v249 = vsel %vm248, %v245, %v247
      %v250 = vsel %vm248, %v247, %v245
      %251 = vrot.lane.b32.xlu0 %v226, 111
      %v252 = vpop.permute.xlu0 %251
      %253 = vrot.lane.b32.xlu0 %v227, 111
      %v254 = vpop.permute.xlu0 %253
      %vm255 = vcmp.lt.s32.totalorder %v233, 111
      %v256 = vsel %vm255, %v252, %v254
      %v257 = vsel %vm255, %v254, %v252
      %258 = vrot.lane.b32.xlu0 %v226, 110
      %v259 = vpop.permute.xlu0 %258
      %260 = vrot.lane.b32.xlu0 %v227, 110
      %v261 = vpop.permute.xlu0 %260
      %vm262 = vcmp.lt.s32.totalorder %v233, 110
      %v263 = vsel %vm262, %v259, %v261
      %v264 = vsel %vm262, %v261, %v259
      %265 = vrot.lane.b32.xlu0 %v226, 96
      %v266 = vpop.permute.xlu0 %265
      %267 = vrot.lane.b32.xlu0 %v227, 96
      %v268 = vpop.permute.xlu0 %267
      %vm269 = vcmp.lt.s32.totalorder %v233, 96
      %v270 = vsel %vm269, %v266, %v268
      %v271 = vsel %vm269, %v268, %v266
      %272 = vrot.lane.b32.xlu0 %v226, 95
      %v273 = vpop.permute.xlu0 %272
      %274 = vrot.lane.b32.xlu0 %v227, 95
      %v275 = vpop.permute.xlu0 %274
      %vm276 = vcmp.lt.s32.totalorder %v233, 95
      %v277 = vsel %vm276, %v273, %v275
      %v278 = vsel %vm276, %v275, %v273
      %279 = vrot.lane.b32.xlu0 %v226, 94
      %v280 = vpop.permute.xlu0 %279
      %281 = vrot.lane.b32.xlu0 %v227, 94
      %v282 = vpop.permute.xlu0 %281
      %vm283 = vcmp.lt.s32.totalorder %v233, 94
      %v284 = vsel %vm283, %v280, %v282
      %v285 = vsel %vm283, %v282, %v280
      %v286 = vpack.c.bf16 %v235, %v226
      %v287 = vpack.c.bf16 %v236, %v227
      %v288 = vpack.c.bf16 %v249, %v242
      %v289 = vpack.c.bf16 %v250, %v243
      %v290 = vpack.c.bf16 %v263, %v256
      %v291 = vpack.c.bf16 %v264, %v257
      %v292 = vpack.c.bf16 %v277, %v270
      %v293 = vpack.c.bf16 %v278, %v271
      %v294 = vpack.c.bf16 %v284, %v284
      %v295 = vpack.c.bf16 %v285, %v285
      %v296 = vld [vmem:[%s1] sm:$0xf]
      %v297 = vld [vmem:[%s2] sm:$0xff]
      %299 = vset.pattern.permute.xlu0 0
      %300 = vperm.xlu0 %299, %v297
      %v301 = vpop.permute.xlu0 %300
      %vm303 = vcmask 588800
      %v305 = vsel %vm303, %v296, 0
      %vm307 = vcmask 1043456
      %v309 = vsel %vm307, %v294, 0
      %v312 = vsel %vm307, %v295, 0
      %314 = vmatprep.subr.bf16.mxu0 0
      %315 = vmatpush1.bf16.msra.mxu0 0
      %316 = vmatprep.subr.bf16.mxu0 0
      %317 = vmatpush1.bf16.msra.mxu0 0
      %318 = vmatprep.subr.bf16.mxu0 0
      %319 = vmatpush1.bf16.msra.mxu0 0
      %320 = vmatprep.subr.bf16.mxu0 %v312
      %321 = vmatpush1.bf16.msra.mxu0 %v309
      %322 = vmatprep.subr.bf16.mxu0 %v293
      %323 = vmatpush1.bf16.msra.mxu0 %v292
      %324 = vmatprep.subr.bf16.mxu0 %v291
      %325 = vmatpush1.bf16.msra.mxu0 %v290
      %326 = vmatprep.subr.bf16.mxu0 %v289
      %327 = vmatpush1.bf16.msra.mxu0 %v288
      %328 = vmatprep.subr.bf16.mxu0 %v287
      %329 = vmatpush1.bf16.msra.mxu0 %v286
      %330 = vmatprep.subr.bf16.mxu0 0
      %331 = vmatpush2.bf16.msra.mxu0 0
      %332 = vmatprep.subr.bf16.mxu0 0
      %333 = vmatpush2.bf16.msra.mxu0 0
      %334 = vmatprep.subr.bf16.mxu0 0
      %335 = vmatpush2.bf16.msra.mxu0 0
      %336 = vmatprep.subr.bf16.mxu0 0
      %337 = vmatpush2.bf16.msra.mxu0 0
      %338 = vmatprep.subr.bf16.mxu0 0
      %339 = vmatpush2.bf16.msra.mxu0 0
      %340 = vmatprep.subr.bf16.mxu0 0
      %341 = vmatpush2.bf16.msra.mxu0 0
      %342 = vmatprep.subr.bf16.mxu0 0
      %343 = vmatpush2.bf16.msra.mxu0 0
      %344 = vmatprep.subr.bf16.mxu0 0
      %345 = vmatpush2.bf16.msra.mxu0 0
      %346 = vmatprep.mubr.bf16.mxu0 0
      %347 = vmatmul.mubr.bf16.gmra.mxu0 %v305
      %v348 = vpop.f32.mrf.mxu0
      %v349 = vadd.f32 %v301, %v348
      %v350 = vpop.f32.mrf.mxu0
      %v351 = vadd.f32 %v301, %v350
      %v352 = vpop.f32.mrf.mxu0
      %v353 = vpop.f32.mrf.mxu0
      %354 = vdwg.mxu0
      %v355 = vmax.f32 %v349, 0.0
      %v356 = vmax.f32 %v351, 0.0
      %357 = vrot.lane.b32.xlu0 %v355, 127
      %v358 = vpop.permute.xlu0 %357
      %359 = vrot.lane.b32.xlu0 %v356, 127
      %v360 = vpop.permute.xlu0 %359
      %v361 = vsel %vm234, %v358, %v360
      %v362 = vsel %vm234, %v360, %v358
      %363 = vrot.lane.b32.xlu0 %v355, 126
      %v364 = vpop.permute.xlu0 %363
      %365 = vrot.lane.b32.xlu0 %v356, 126
      %v366 = vpop.permute.xlu0 %365
      %v367 = vsel %vm241, %v364, %v366
      %v368 = vsel %vm241, %v366, %v364
      %369 = vrot.lane.b32.xlu0 %v355, 112
      %v370 = vpop.permute.xlu0 %369
      %371 = vrot.lane.b32.xlu0 %v356, 112
      %v372 = vpop.permute.xlu0 %371
      %v373 = vsel %vm248, %v370, %v372
      %v374 = vsel %vm248, %v372, %v370
      %375 = vrot.lane.b32.xlu0 %v355, 111
      %v376 = vpop.permute.xlu0 %375
      %377 = vrot.lane.b32.xlu0 %v356, 111
      %v378 = vpop.permute.xlu0 %377
      %v379 = vsel %vm255, %v376, %v378
      %v380 = vsel %vm255, %v378, %v376
      %381 = vrot.lane.b32.xlu0 %v355, 110
      %v382 = vpop.permute.xlu0 %381
      %383 = vrot.lane.b32.xlu0 %v356, 110
      %v384 = vpop.permute.xlu0 %383
      %v385 = vsel %vm262, %v382, %v384
      %v386 = vsel %vm262, %v384, %v382
      %387 = vrot.lane.b32.xlu0 %v355, 96
      %v388 = vpop.permute.xlu0 %387
      %389 = vrot.lane.b32.xlu0 %v356, 96
      %v390 = vpop.permute.xlu0 %389
      %v391 = vsel %vm269, %v388, %v390
      %v392 = vsel %vm269, %v390, %v388
      %393 = vrot.lane.b32.xlu0 %v355, 95
      %v394 = vpop.permute.xlu0 %393
      %395 = vrot.lane.b32.xlu0 %v356, 95
      %v396 = vpop.permute.xlu0 %395
      %v397 = vsel %vm276, %v394, %v396
      %v398 = vsel %vm276, %v396, %v394
      %399 = vrot.lane.b32.xlu0 %v355, 94
      %v400 = vpop.permute.xlu0 %399
      %401 = vrot.lane.b32.xlu0 %v356, 94
      %v402 = vpop.permute.xlu0 %401
      %v403 = vsel %vm283, %v400, %v402
      %v404 = vsel %vm283, %v402, %v400
      %v405 = vpack.c.bf16 %v361, %v355
      %v406 = vpack.c.bf16 %v362, %v356
      %v407 = vpack.c.bf16 %v373, %v367
      %v408 = vpack.c.bf16 %v374, %v368
      %v409 = vpack.c.bf16 %v385, %v379
      %v410 = vpack.c.bf16 %v386, %v380
      %v411 = vpack.c.bf16 %v397, %v391
      %v412 = vpack.c.bf16 %v398, %v392
      %v413 = vpack.c.bf16 %v403, %v403
      %v414 = vpack.c.bf16 %v404, %v404
      %v415 = vld [vmem:[%s3] sm:$0x3]
      %v416 = vld [vmem:[%s4] sm:$0xf]
      %418 = vset.pattern.permute.xlu0 0
      %419 = vperm.xlu0 %418, %v416
      %v420 = vpop.permute.xlu0 %419
      %v423 = vsel %vm303, %v415, 0
      %v426 = vsel %vm307, %v413, 0
      %v429 = vsel %vm307, %v414, 0
      %431 = vmatprep.subr.bf16.mxu0 0
      %432 = vmatpush1.bf16.msra.mxu0 0
      %433 = vmatprep.subr.bf16.mxu0 0
      %434 = vmatpush1.bf16.msra.mxu0 0
      %435 = vmatprep.subr.bf16.mxu0 0
      %436 = vmatpush1.bf16.msra.mxu0 0
      %437 = vmatprep.subr.bf16.mxu0 %v429
      %438 = vmatpush1.bf16.msra.mxu0 %v426
      %439 = vmatprep.subr.bf16.mxu0 %v412
      %440 = vmatpush1.bf16.msra.mxu0 %v411
      %441 = vmatprep.subr.bf16.mxu0 %v410
      %442 = vmatpush1.bf16.msra.mxu0 %v409
      %443 = vmatprep.subr.bf16.mxu0 %v408
      %444 = vmatpush1.bf16.msra.mxu0 %v407
      %445 = vmatprep.subr.bf16.mxu0 %v406
      %446 = vmatpush1.bf16.msra.mxu0 %v405
      %447 = vmatprep.subr.bf16.mxu0 0
      %448 = vmatpush2.bf16.msra.mxu0 0
      %449 = vmatprep.subr.bf16.mxu0 0
      %450 = vmatpush2.bf16.msra.mxu0 0
      %451 = vmatprep.subr.bf16.mxu0 0
      %452 = vmatpush2.bf16.msra.mxu0 0
      %453 = vmatprep.subr.bf16.mxu0 0
      %454 = vmatpush2.bf16.msra.mxu0 0
      %455 = vmatprep.subr.bf16.mxu0 0
      %456 = vmatpush2.bf16.msra.mxu0 0
      %457 = vmatprep.subr.bf16.mxu0 0
      %458 = vmatpush2.bf16.msra.mxu0 0
      %459 = vmatprep.subr.bf16.mxu0 0
      %460 = vmatpush2.bf16.msra.mxu0 0
      %461 = vmatprep.subr.bf16.mxu0 0
      %462 = vmatpush2.bf16.msra.mxu0 0
      %463 = vmatprep.mubr.bf16.mxu0 0
      %464 = vmatmul.mubr.bf16.gmra.mxu0 %v423
      %v465 = vpop.f32.mrf.mxu0
      %v466 = vadd.f32 %v420, %v465
      %v467 = vpop.f32.mrf.mxu0
      %v468 = vadd.f32 %v420, %v467
      %v469 = vpop.f32.mrf.mxu0
      %v470 = vpop.f32.mrf.mxu0
      %471 = vdwg.mxu0
      %v472 = vmax.f32 %v466, 0.0
      %v473 = vmax.f32 %v468, 0.0
      %474 = vrot.lane.b32.xlu0 %v472, 127
      %v475 = vpop.permute.xlu0 %474
      %476 = vrot.lane.b32.xlu0 %v473, 127
      %v477 = vpop.permute.xlu0 %476
      %v478 = vsel %vm234, %v475, %v477
      %v479 = vsel %vm234, %v477, %v475
      %v480 = vmax.f32 %v472, %v478
      %v481 = vmax.f32 %v473, %v479
      %482 = vrot.lane.b32.xlu0 %v472, 112
      %v483 = vpop.permute.xlu0 %482
      %484 = vrot.lane.b32.xlu0 %v473, 112
      %v485 = vpop.permute.xlu0 %484
      %v486 = vsel %vm248, %v483, %v485
      %v487 = vsel %vm248, %v485, %v483
      %v488 = vmax.f32 %v480, %v486
      %v489 = vmax.f32 %v481, %v487
      %490 = vrot.lane.b32.xlu0 %v472, 111
      %v491 = vpop.permute.xlu0 %490
      %492 = vrot.lane.b32.xlu0 %v473, 111
      %v493 = vpop.permute.xlu0 %492
      %v494 = vsel %vm255, %v491, %v493
      %v495 = vsel %vm255, %v493, %v491
      %v496 = vmax.f32 %v488, %v494
      %v497 = vmax.f32 %v489, %v495
      %v500 = vcombine.low %v496, %v497
      %502 = vst [vmem:[%s224] sm:$0xff] %v500
      %p503 = scmp.lt.s32.totalorder %s16, 1
      %s504 = scalar_select %p503, %s16, 1
      %s505 = smul.addr %s504, 2
      %s506 = smul.addr %s505, 4
      %s507 = scalar_lea.vmem %s5, %s506
      // Predicated region
      $region41: #{unet_down_pallas.1} parent=39 // pred_check
        %p508 = pneg %p144
      $region42: #{unet_down_pallas.1} parent=39 // pred_check_branch
        %510 = sbr.rel (%p508) target = $region44
      $region43: #{unet_down_pallas.1} parent=39 // pred_region
        _
      $region44: #{unet_down_pallas.1} parent=39 // pred_fallthru
        _
    $region40: #{unet_down_pallas.1} parent=5 // pred_fallthru
      _
    %p511 = scmp.le.s32.totalorder 2, %s11
    // Predicated region
    $region45: #{unet_down_pallas.1} parent=5 // pred_check
      %p512 = pneg %p511
    $region46: #{unet_down_pallas.1} parent=5 // pred_check_branch
      %514 = sbr.rel (%p512) target = $region48
    $region47: #{unet_down_pallas.1} parent=5 // pred_region
      %s515 = ssub.s32 %s11, 2
      // Predicated region
      $region49: #{unet_down_pallas.1} parent=47 // pred_check
        %p516 = pneg %p150
      $region50: #{unet_down_pallas.1} parent=47 // pred_check_branch
        %518 = sbr.rel (%p516) target = $region52
      $region51: #{unet_down_pallas.1} parent=47 // pred_region
        %p519 = scmp.lt.s32.totalorder %s17, 1
        %s520 = scalar_select %p519, %s17, 1
        %s521 = smul.addr %s520, 2
        %s522 = smul.addr %s521, 4
        %s523 = scalar_lea.vmem %s5, %s522
      $region52: #{unet_down_pallas.1} parent=47 // pred_fallthru
        _
    $region48: #{unet_down_pallas.1} parent=5 // pred_fallthru
      _
  $region6: #{unet_down_pallas.1} parent=0 // loop_footer
    %s15 = sadd.s32 1, %s11
  $region7: #{unet_down_pallas.1} parent=0 // loop_footer_branch
    %10 = sbr.rel target = $region3
  $region8: #{unet_down_pallas.1} parent=0 // loop_exit
    _

</llo_original>
